<compile_context>
chip_gen: v6e
topology: v6e:2x2x1
jax: 0.10.0
libtpu: 0.0.40
codegen_flags: <defaults>
</compile_context>

<pallas_src>
import functools

import jax
import jax.numpy as jnp
from jax.experimental import pallas as pl
from jax.experimental.pallas import tpu as pltpu  # noqa: F401  (TPU backend)


def _fused_gcn_kernel(a_ref, deg_in_ref, deg_out_ref, h_ref, w_ref, b_ref,
                      o_ref, *, num_layers):
    """All GraphConv layers fused; operands are whole VMEM-resident blocks."""
    a = a_ref[...]                 # (N, N)   adjacency WITHOUT self loops
    deg_in = deg_in_ref[...]       # (N, 1)   row sums  (in-degree,  dest norm)
    deg_out = deg_out_ref[...]     # (N, 1)   col sums  (out-degree, src norm)
    h = h_ref[...]                 # (N, Fpad)

    for l in range(num_layers):    # static unroll; weights indexed statically
        k = float(l + 1)           # self-loop multiplicity after l+1 add_self_loop calls
        # deg + k >= k >= 1, so DGL's clamp(min=1) is redundant. rsqrt -> EUP.
        norm_src = jax.lax.rsqrt(deg_out + k)                             # (N, 1)
        norm_dst = jax.lax.rsqrt(deg_in + k)                              # (N, 1)

        xw = jnp.dot(h, w_ref[l], preferred_element_type=jnp.float32)    # (N, Fpad) MXU
        msg = norm_src * xw
        # A_hat @ msg with A_hat = A + k*I; self loops never materialized.
        agg = jnp.dot(a, msg, preferred_element_type=jnp.float32) + k * msg
        out = norm_dst * agg + b_ref[l]                                   # (1, Fpad) bcast
        if l < num_layers - 1:
            out = jnp.maximum(out, 0.0)
        h = out

    o_ref[...] = h


def _round_up(x, m):
    return ((x + m - 1) // m) * m


def _pad2d(x, rows, cols):
    return jnp.pad(x, ((0, rows - x.shape[0]), (0, cols - x.shape[1])))


def simple_gcn_forward(adj, features, params):
    """adj: (N, N) dense adjacency WITHOUT self loops; features: (N, in_feats)."""
    n = adj.shape[0]
    in_feats = features.shape[1]
    out_feats = params[-1][0].shape[1]
    num_layers = len(params)

    # Lane-dense padding: all feature dims to a common multiple of 128,
    # node dim to a multiple of 8 (sublane).
    f_pad = _round_up(max([in_feats] + [w.shape[1] for w, _ in params]), 128)
    n_pad = _round_up(n, 8)

    adj_p = _pad2d(adj.astype(jnp.float32), n_pad, n_pad)
    h_p = _pad2d(features.astype(jnp.float32), n_pad, f_pad)
    w_stack = jnp.stack([_pad2d(w, f_pad, f_pad) for w, _ in params])   # (L, Fp, Fp)
    b_stack = jnp.stack([_pad2d(b, 1, f_pad) for _, b in params])       # (L, 1, Fp)

    # Degrees of the ORIGINAL graph, hoisted out of the kernel / layer loop.
    # (Padding rows/cols are all-zero, so padded sums equal true degrees.)
    deg_in = jnp.sum(adj_p, axis=1, keepdims=True)                      # (Np, 1)
    deg_out = jnp.sum(adj_p, axis=0)[:, None]                           # (Np, 1)

    kernel = functools.partial(_fused_gcn_kernel, num_layers=num_layers)
    out = pl.pallas_call(
        kernel,
        out_shape=jax.ShapeDtypeStruct((n_pad, f_pad), jnp.float32),
    )(adj_p, deg_in, deg_out, h_p, w_stack, b_stack)
    return out[:n, :out_feats]


def init_simple_gcn_params(key, in_feats, out_feats, hidden_size, num_layers):
    """Deterministic Glorot-style init matching GraphConv(in, out) shapes."""
    dims = [in_feats] + [hidden_size] * (num_layers - 1) + [out_feats]
    params = []
    for l in range(num_layers):
        key, kw = jax.random.split(key)
        fan_in, fan_out = dims[l], dims[l + 1]
        scale = jnp.sqrt(6.0 / (fan_in + fan_out))
        w = jax.random.uniform(kw, (fan_in, fan_out), jnp.float32, -scale, scale)
        b = jnp.zeros((1, fan_out), jnp.float32)
        params.append((w, b))
    return params


def simple_gcn_reference(adj, features, params):
    """Pure-JAX reference of the same forward pass (for the correctness check)."""
    n = adj.shape[0]
    eye = jnp.eye(n, dtype=jnp.float32)
    a = adj.astype(jnp.float32)
    h = features.astype(jnp.float32)
    num_layers = len(params)
    hp = jax.lax.Precision.HIGHEST
    for l, (w, b) in enumerate(params):
        a = a + eye
        deg_out = jnp.maximum(jnp.sum(a, axis=0), 1.0)[:, None]
        deg_in = jnp.maximum(jnp.sum(a, axis=1), 1.0)[:, None]
        xw = jnp.dot(h, w, precision=hp)
        msg = xw * jax.lax.rsqrt(deg_out)
        agg = jnp.dot(a, msg, precision=hp)
        out = agg * jax.lax.rsqrt(deg_in) + b
        if l < num_layers - 1:
            out = jnp.maximum(out, 0.0)
        h = out
    return h


if __name__ == "__main__":
    key = jax.random.PRNGKey(0)

    # Small shapes implied by the module: N graph nodes, in/hidden/out features.
    N, IN_FEATS, HIDDEN, OUT_FEATS, NUM_LAYERS = 8, 4, 32, 4, 3

    key, k_adj, k_feat, k_param = jax.random.split(key, 4)

    # Random undirected graph (symmetric 0/1 adjacency, no self loops).
    upper = (jax.random.uniform(k_adj, (N, N)) > 0.5).astype(jnp.float32)
    upper = jnp.triu(upper, k=1)
    adj = upper + upper.T

    features = jax.random.normal(k_feat, (N, IN_FEATS), jnp.float32)
    params = init_simple_gcn_params(k_param, IN_FEATS, OUT_FEATS, HIDDEN, NUM_LAYERS)

    out = simple_gcn_forward(adj, features, params)
    out = jax.block_until_ready(out)
    assert out.shape == (N, OUT_FEATS)

    ref = simple_gcn_reference(adj, features, params)
    assert jnp.allclose(out, ref, rtol=1e-3, atol=1e-3), (
        f"max abs diff {jnp.max(jnp.abs(out - ref))}")

    print("KERNEL_OK")
</pallas_src>

<mosaic_0001>
module attributes {stable_mosaic.version = 11 : i64} {
  func.func @_fused_gcn_kernel(%arg0: memref<8x8xf32, #tpu.memory_space<vmem>>, %arg1: memref<8x1xf32, #tpu.memory_space<vmem>>, %arg2: memref<8x1xf32, #tpu.memory_space<vmem>>, %arg3: memref<8x128xf32, #tpu.memory_space<vmem>>, %arg4: memref<3x128x128xf32, #tpu.memory_space<vmem>>, %arg5: memref<3x1x128xf32, #tpu.memory_space<vmem>>, %arg6: memref<8x128xf32, #tpu.memory_space<vmem>>) attributes {dimension_semantics = [], scalar_prefetch = 0 : i64, scratch_operands = 0 : i64, tpu.core_type = #tpu.core_type<tc>} {
    %c0 = arith.constant 0 : index
    %c0_0 = arith.constant 0 : index
    %0 = vector.load %arg0[%c0, %c0_0] : memref<8x8xf32, #tpu.memory_space<vmem>>, vector<8x8xf32>
    %c0_1 = arith.constant 0 : index
    %c0_2 = arith.constant 0 : index
    %1 = vector.load %arg1[%c0_1, %c0_2] : memref<8x1xf32, #tpu.memory_space<vmem>>, vector<8x1xf32>
    %c0_3 = arith.constant 0 : index
    %c0_4 = arith.constant 0 : index
    %2 = vector.load %arg2[%c0_3, %c0_4] : memref<8x1xf32, #tpu.memory_space<vmem>>, vector<8x1xf32>
    %c0_5 = arith.constant 0 : index
    %c0_6 = arith.constant 0 : index
    %3 = vector.load %arg3[%c0_5, %c0_6] : memref<8x128xf32, #tpu.memory_space<vmem>>, vector<8x128xf32>
    %cst = arith.constant 1.000000e+00 : f32
    %4 = vector.broadcast %cst : f32 to vector<8x1xf32>
    %5 = arith.addf %2, %4 : vector<8x1xf32>
    %6 = math.rsqrt %5 : vector<8x1xf32>
    %cst_7 = arith.constant 1.000000e+00 : f32
    %7 = vector.broadcast %cst_7 : f32 to vector<8x1xf32>
    %8 = arith.addf %1, %7 : vector<8x1xf32>
    %9 = math.rsqrt %8 : vector<8x1xf32>
    %c0_8 = arith.constant 0 : index
    %c0_9 = arith.constant 0 : index
    %c0_10 = arith.constant 0 : index
    %10 = vector.load %arg4[%c0_8, %c0_9, %c0_10] : memref<3x128x128xf32, #tpu.memory_space<vmem>>, vector<1x128x128xf32>
    %11 = vector.shape_cast %10 : vector<1x128x128xf32> to vector<128x128xf32>
    %cst_11 = arith.constant dense<0.000000e+00> : vector<8x128xf32>
    %12 = tpu.matmul %3, %11, %cst_11 {dimension_numbers = #tpu.dot_dimension_numbers<[1], [0], [0], [1], [0, 0, 1, 1], [], []>} : vector<8x128xf32>, vector<128x128xf32>, vector<8x128xf32> -> vector<8x128xf32>
    %13 = vector.broadcast %6 : vector<8x1xf32> to vector<8x128xf32>
    %14 = arith.mulf %13, %12 : vector<8x128xf32>
    %cst_12 = arith.constant dense<0.000000e+00> : vector<8x128xf32>
    %15 = tpu.matmul %0, %14, %cst_12 {dimension_numbers = #tpu.dot_dimension_numbers<[1], [0], [0], [1], [0, 0, 1, 1], [], []>} : vector<8x8xf32>, vector<8x128xf32>, vector<8x128xf32> -> vector<8x128xf32>
    %cst_13 = arith.constant 1.000000e+00 : f32
    %16 = vector.broadcast %cst_13 : f32 to vector<8x128xf32>
    %17 = arith.mulf %16, %14 : vector<8x128xf32>
    %18 = arith.addf %15, %17 : vector<8x128xf32>
    %19 = vector.broadcast %9 : vector<8x1xf32> to vector<8x128xf32>
    %20 = arith.mulf %19, %18 : vector<8x128xf32>
    %c0_14 = arith.constant 0 : index
    %c0_15 = arith.constant 0 : index
    %c0_16 = arith.constant 0 : index
    %21 = vector.load %arg5[%c0_14, %c0_15, %c0_16] : memref<3x1x128xf32, #tpu.memory_space<vmem>>, vector<1x1x128xf32>
    %22 = vector.shape_cast %21 : vector<1x1x128xf32> to vector<1x128xf32>
    %23 = vector.broadcast %22 : vector<1x128xf32> to vector<8x128xf32>
    %24 = arith.addf %20, %23 : vector<8x128xf32>
    %cst_17 = arith.constant 0.000000e+00 : f32
    %25 = vector.broadcast %cst_17 : f32 to vector<8x128xf32>
    %26 = arith.maximumf %24, %25 : vector<8x128xf32>
    %cst_18 = arith.constant 2.000000e+00 : f32
    %27 = vector.broadcast %cst_18 : f32 to vector<8x1xf32>
    %28 = arith.addf %2, %27 : vector<8x1xf32>
    %29 = math.rsqrt %28 : vector<8x1xf32>
    %cst_19 = arith.constant 2.000000e+00 : f32
    %30 = vector.broadcast %cst_19 : f32 to vector<8x1xf32>
    %31 = arith.addf %1, %30 : vector<8x1xf32>
    %32 = math.rsqrt %31 : vector<8x1xf32>
    %c1 = arith.constant 1 : index
    %c0_20 = arith.constant 0 : index
    %c0_21 = arith.constant 0 : index
    %33 = vector.load %arg4[%c1, %c0_20, %c0_21] : memref<3x128x128xf32, #tpu.memory_space<vmem>>, vector<1x128x128xf32>
    %34 = vector.shape_cast %33 : vector<1x128x128xf32> to vector<128x128xf32>
    %cst_22 = arith.constant dense<0.000000e+00> : vector<8x128xf32>
    %35 = tpu.matmul %26, %34, %cst_22 {dimension_numbers = #tpu.dot_dimension_numbers<[1], [0], [0], [1], [0, 0, 1, 1], [], []>} : vector<8x128xf32>, vector<128x128xf32>, vector<8x128xf32> -> vector<8x128xf32>
    %36 = vector.broadcast %29 : vector<8x1xf32> to vector<8x128xf32>
    %37 = arith.mulf %36, %35 : vector<8x128xf32>
    %cst_23 = arith.constant dense<0.000000e+00> : vector<8x128xf32>
    %38 = tpu.matmul %0, %37, %cst_23 {dimension_numbers = #tpu.dot_dimension_numbers<[1], [0], [0], [1], [0, 0, 1, 1], [], []>} : vector<8x8xf32>, vector<8x128xf32>, vector<8x128xf32> -> vector<8x128xf32>
    %cst_24 = arith.constant 2.000000e+00 : f32
    %39 = vector.broadcast %cst_24 : f32 to vector<8x128xf32>
    %40 = arith.mulf %39, %37 : vector<8x128xf32>
    %41 = arith.addf %38, %40 : vector<8x128xf32>
    %42 = vector.broadcast %32 : vector<8x1xf32> to vector<8x128xf32>
    %43 = arith.mulf %42, %41 : vector<8x128xf32>
    %c1_25 = arith.constant 1 : index
    %c0_26 = arith.constant 0 : index
    %c0_27 = arith.constant 0 : index
    %44 = vector.load %arg5[%c1_25, %c0_26, %c0_27] : memref<3x1x128xf32, #tpu.memory_space<vmem>>, vector<1x1x128xf32>
    %45 = vector.shape_cast %44 : vector<1x1x128xf32> to vector<1x128xf32>
    %46 = vector.broadcast %45 : vector<1x128xf32> to vector<8x128xf32>
    %47 = arith.addf %43, %46 : vector<8x128xf32>
    %cst_28 = arith.constant 0.000000e+00 : f32
    %48 = vector.broadcast %cst_28 : f32 to vector<8x128xf32>
    %49 = arith.maximumf %47, %48 : vector<8x128xf32>
    %cst_29 = arith.constant 3.000000e+00 : f32
    %50 = vector.broadcast %cst_29 : f32 to vector<8x1xf32>
    %51 = arith.addf %2, %50 : vector<8x1xf32>
    %52 = math.rsqrt %51 : vector<8x1xf32>
    %cst_30 = arith.constant 3.000000e+00 : f32
    %53 = vector.broadcast %cst_30 : f32 to vector<8x1xf32>
    %54 = arith.addf %1, %53 : vector<8x1xf32>
    %55 = math.rsqrt %54 : vector<8x1xf32>
    %c2 = arith.constant 2 : index
    %c0_31 = arith.constant 0 : index
    %c0_32 = arith.constant 0 : index
    %56 = vector.load %arg4[%c2, %c0_31, %c0_32] : memref<3x128x128xf32, #tpu.memory_space<vmem>>, vector<1x128x128xf32>
    %57 = vector.shape_cast %56 : vector<1x128x128xf32> to vector<128x128xf32>
    %cst_33 = arith.constant dense<0.000000e+00> : vector<8x128xf32>
    %58 = tpu.matmul %49, %57, %cst_33 {dimension_numbers = #tpu.dot_dimension_numbers<[1], [0], [0], [1], [0, 0, 1, 1], [], []>} : vector<8x128xf32>, vector<128x128xf32>, vector<8x128xf32> -> vector<8x128xf32>
    %59 = vector.broadcast %52 : vector<8x1xf32> to vector<8x128xf32>
    %60 = arith.mulf %59, %58 : vector<8x128xf32>
    %cst_34 = arith.constant dense<0.000000e+00> : vector<8x128xf32>
    %61 = tpu.matmul %0, %60, %cst_34 {dimension_numbers = #tpu.dot_dimension_numbers<[1], [0], [0], [1], [0, 0, 1, 1], [], []>} : vector<8x8xf32>, vector<8x128xf32>, vector<8x128xf32> -> vector<8x128xf32>
    %cst_35 = arith.constant 3.000000e+00 : f32
    %62 = vector.broadcast %cst_35 : f32 to vector<8x128xf32>
    %63 = arith.mulf %62, %60 : vector<8x128xf32>
    %64 = arith.addf %61, %63 : vector<8x128xf32>
    %65 = vector.broadcast %55 : vector<8x1xf32> to vector<8x128xf32>
    %66 = arith.mulf %65, %64 : vector<8x128xf32>
    %c2_36 = arith.constant 2 : index
    %c0_37 = arith.constant 0 : index
    %c0_38 = arith.constant 0 : index
    %67 = vector.load %arg5[%c2_36, %c0_37, %c0_38] : memref<3x1x128xf32, #tpu.memory_space<vmem>>, vector<1x1x128xf32>
    %68 = vector.shape_cast %67 : vector<1x1x128xf32> to vector<1x128xf32>
    %69 = vector.broadcast %68 : vector<1x128xf32> to vector<8x128xf32>
    %70 = arith.addf %66, %69 : vector<8x128xf32>
    %c0_39 = arith.constant 0 : index
    %c0_40 = arith.constant 0 : index
    %71 = vector.load %arg6[%c0_39, %c0_40] : memref<8x128xf32, #tpu.memory_space<vmem>>, vector<8x128xf32>
    tpu.vector_store %arg6[%c0_39, %c0_40], %70 {strides = array<i32>} : memref<8x128xf32, #tpu.memory_space<vmem>>, vector<8x128xf32>,
    return
  }
}

</mosaic_0001>

<llo_original>
// kernel: tpu_custom_call.1
$region0: #{tpu_custom_call.1}
  #allocation0 [shape = 'u32[]', space=smem, size = 0x4, offset = 0x4, fixed_abs, tag = 'smem constant byte address 0x4 - core index']
  #allocation1 [shape = 'u32[144,128]{1,0:T(1,128)}', space=vmem, size = 0x12000, scoped, tag = 'internal scratch']
  %s0 = inlined_call_operand.vmem [shape: f32[8,8], index: 0, kind: input, shape index: {}]
  %s1 = inlined_call_operand.vmem [shape: f32[8,1], index: 1, kind: input, shape index: {}]
  %s2 = inlined_call_operand.vmem [shape: f32[8,1], index: 2, kind: input, shape index: {}]
  %s3 = inlined_call_operand.vmem [shape: f32[8,128], index: 3, kind: input, shape index: {}]
  %s4 = inlined_call_operand.hbm [shape: f32[3,128,128], index: 4, kind: input, shape index: {}]
  %s5 = inlined_call_operand.vmem [shape: f32[3,1,128], index: 5, kind: input, shape index: {}]
  %s6 = inlined_call_operand.hbm [shape: f32[8,128], index: 6, kind: output, shape index: {}]
  %s7 = sld [smem:[#allocation0]]
  $region38: #{tpu_custom_call.1} parent=0
    _
  %s9 = ssub.s32 1, %s7
  %s10 = scalar_select 0, %s9, %s7
  $region1: #{tpu_custom_call.1} parent=0
    #allocation2 [shape = 'u8[196608]{0}', space=vmem, size = 0x30000, scoped, tag = 'input window, operand 4, single buffered']
    #allocation3 [shape = 's32[1]{0}', space=sflag, size = 0x4, scoped, tag = 'scoped memory for tpu_custom_call.1']
    #allocation4 [shape = 's32[1]{0}', space=sflag, size = 0x4, scoped, tag = 'scoped memory for tpu_custom_call.1']
    #allocation5 [shape = 'u8[4096]{0}', space=vmem, size = 0x1000, scoped, tag = 'output window, operand 0, single buffered']
    %11 = vsyncpa [#allocation3], 0
    %12 = vsyncpa [#allocation4], 0
    // Predicated region
    $region2: #{tpu_custom_call.1} parent=1 // pred_check
      _
    $region3: #{tpu_custom_call.1} parent=1 // pred_check_branch
      %14 = sbr.rel (0) target = $region5
    $region4: #{tpu_custom_call.1} parent=1 // pred_region
      _
    $region5: #{tpu_custom_call.1} parent=1 // pred_fallthru
      _
    // Predicated region
    $region6: #{tpu_custom_call.1} parent=1 // pred_check
      _
    $region7: #{tpu_custom_call.1} parent=1 // pred_check_branch
      %16 = sbr.rel (0) target = $region9
    $region8: #{tpu_custom_call.1} parent=1 // pred_region
      _
    $region9: #{tpu_custom_call.1} parent=1 // pred_fallthru
      _
    // Predicated region
    $region10: #{tpu_custom_call.1} parent=1 // pred_check
      _
    $region11: #{tpu_custom_call.1} parent=1 // pred_check_branch
      %18 = sbr.rel (0) target = $region13
    $region12: #{tpu_custom_call.1} parent=1 // pred_region
      _
    $region13: #{tpu_custom_call.1} parent=1 // pred_fallthru
      _
    // Predicated region
    $region14: #{tpu_custom_call.1} parent=1 // pred_check
      _
    $region15: #{tpu_custom_call.1} parent=1 // pred_check_branch
      %20 = sbr.rel (0) target = $region17
    $region16: #{tpu_custom_call.1} parent=1 // pred_region
      _
    $region17: #{tpu_custom_call.1} parent=1 // pred_fallthru
      _
    // Predicated region
    $region18: #{tpu_custom_call.1} parent=1 // pred_check
      _
    $region19: #{tpu_custom_call.1} parent=1 // pred_check_branch
      %22 = sbr.rel (0) target = $region21
    $region20: #{tpu_custom_call.1} parent=1 // pred_region
      %s24 = ssub.s32 6144, 6144
      %25 = vsyncadd [#allocation3], %s24
      %s26 = sshll.u32 [#allocation2], 4
      %s27 = int_to_ptr.vmem [resolvable:$true] %s26
      %32 = dma.hbm_to_vmem [thread:$0]  %s4, 6144, %s27, [#allocation3], 128, 128, 8
    $region21: #{tpu_custom_call.1} parent=1 // pred_fallthru
      _
    // Predicated region
    $region22: #{tpu_custom_call.1} parent=1 // pred_check
      _
    $region23: #{tpu_custom_call.1} parent=1 // pred_check_branch
      %34 = sbr.rel (0) target = $region25
    $region24: #{tpu_custom_call.1} parent=1 // pred_region
      _
    $region25: #{tpu_custom_call.1} parent=1 // pred_fallthru
      _
    // Predicated region
    $region26: #{tpu_custom_call.1} parent=1 // pred_check
      _
    $region27: #{tpu_custom_call.1} parent=1 // pred_check_branch
      %36 = sbr.rel (0) target = $region29
    $region28: #{tpu_custom_call.1} parent=1 // pred_region
      %37 = dma.done [#allocation3], 6144
    $region29: #{tpu_custom_call.1} parent=1 // pred_fallthru
      _
    %v38 = vld [vmem:[%s0] sm:$0xff]
    %v39 = vld [vmem:[%s1] sm:$0xff]
    %v40 = vld [vmem:[%s2] sm:$0xff]
    %v41 = vld [vmem:[%s3] sm:$0xff]
    %v42 = vadd.f32 %v40, 1.0
    %v43 = vrsqrt.pop %v42
    %v44 = vadd.f32 %v39, 1.0
    %v45 = vrsqrt.pop %v44
    %v46 = vld [vmem:[#allocation2] sm:$0xff]
    %v47 = vld [vmem:[#allocation2 + $0x8] sm:$0xff]
    %v48 = vld [vmem:[#allocation2 + $0x10] sm:$0xff]
    %v49 = vld [vmem:[#allocation2 + $0x18] sm:$0xff]
    %v50 = vld [vmem:[#allocation2 + $0x20] sm:$0xff]
    %v51 = vld [vmem:[#allocation2 + $0x28] sm:$0xff]
    %v52 = vld [vmem:[#allocation2 + $0x30] sm:$0xff]
    %v53 = vld [vmem:[#allocation2 + $0x38] sm:$0xff]
    %v54 = vld [vmem:[#allocation2 + $0x40] sm:$0xff]
    %v55 = vld [vmem:[#allocation2 + $0x48] sm:$0xff]
    %v56 = vld [vmem:[#allocation2 + $0x50] sm:$0xff]
    %v57 = vld [vmem:[#allocation2 + $0x58] sm:$0xff]
    %v58 = vld [vmem:[#allocation2 + $0x60] sm:$0xff]
    %v59 = vld [vmem:[#allocation2 + $0x68] sm:$0xff]
    %v60 = vld [vmem:[#allocation2 + $0x70] sm:$0xff]
    %v61 = vld [vmem:[#allocation2 + $0x78] sm:$0xff]
    %62 = vmatprep.subr.mxu0 0.0
    %63 = vmatpush1.msra.mxu0 %v61
    %64 = vmatprep.subr.mxu0 0.0
    %65 = vmatpush1.msra.mxu0 %v60
    %66 = vmatprep.subr.mxu0 0.0
    %67 = vmatpush1.msra.mxu0 %v59
    %68 = vmatprep.subr.mxu0 0.0
    %69 = vmatpush1.msra.mxu0 %v58
    %70 = vmatprep.subr.mxu0 0.0
    %71 = vmatpush1.msra.mxu0 %v57
    %72 = vmatprep.subr.mxu0 0.0
    %73 = vmatpush1.msra.mxu0 %v56
    %74 = vmatprep.subr.mxu0 0.0
    %75 = vmatpush1.msra.mxu0 %v55
    %76 = vmatprep.subr.mxu0 0.0
    %77 = vmatpush1.msra.mxu0 %v54
    %78 = vmatprep.subr.mxu0 0.0
    %79 = vmatpush1.msra.mxu0 %v53
    %80 = vmatprep.subr.mxu0 0.0
    %81 = vmatpush1.msra.mxu0 %v52
    %82 = vmatprep.subr.mxu0 0.0
    %83 = vmatpush1.msra.mxu0 %v51
    %84 = vmatprep.subr.mxu0 0.0
    %85 = vmatpush1.msra.mxu0 %v50
    %86 = vmatprep.subr.mxu0 0.0
    %87 = vmatpush1.msra.mxu0 %v49
    %88 = vmatprep.subr.mxu0 0.0
    %89 = vmatpush1.msra.mxu0 %v48
    %90 = vmatprep.subr.mxu0 0.0
    %91 = vmatpush1.msra.mxu0 %v47
    %92 = vmatprep.subr.mxu0 0.0
    %93 = vmatpush1.msra.mxu0 %v46
    %94 = vmatprep.subr.mxu0 0.0
    %95 = vmatpush2.msra.mxu0 0.0
    %96 = vmatprep.subr.mxu0 0.0
    %97 = vmatpush2.msra.mxu0 0.0
    %98 = vmatprep.subr.mxu0 0.0
    %99 = vmatpush2.msra.mxu0 0.0
    %100 = vmatprep.subr.mxu0 0.0
    %101 = vmatpush2.msra.mxu0 0.0
    %102 = vmatprep.subr.mxu0 0.0
    %103 = vmatpush2.msra.mxu0 0.0
    %104 = vmatprep.subr.mxu0 0.0
    %105 = vmatpush2.msra.mxu0 0.0
    %106 = vmatprep.subr.mxu0 0.0
    %107 = vmatpush2.msra.mxu0 0.0
    %108 = vmatprep.subr.mxu0 0.0
    %109 = vmatpush2.msra.mxu0 0.0
    %110 = vmatprep.subr.mxu0 0.0
    %111 = vmatpush2.msra.mxu0 0.0
    %112 = vmatprep.subr.mxu0 0.0
    %113 = vmatpush2.msra.mxu0 0.0
    %114 = vmatprep.subr.mxu0 0.0
    %115 = vmatpush2.msra.mxu0 0.0
    %116 = vmatprep.subr.mxu0 0.0
    %117 = vmatpush2.msra.mxu0 0.0
    %118 = vmatprep.subr.mxu0 0.0
    %119 = vmatpush2.msra.mxu0 0.0
    %120 = vmatprep.subr.mxu0 0.0
    %121 = vmatpush2.msra.mxu0 0.0
    %122 = vmatprep.subr.mxu0 0.0
    %123 = vmatpush2.msra.mxu0 0.0
    %124 = vmatprep.subr.mxu0 0.0
    %125 = vmatpush2.msra.mxu0 0.0
    %126 = vmatprep.mubr.f32.mxu0 0.0
    %127 = vmatmul.mubr.f32.gmra.mxu0 %v41
    %v128 = vpop.f32.mrf.mxu0
    %v129 = vadd.f32 0.0, %v128
    %v130 = vpop.f32.mrf.mxu0
    %131 = vdwg.mxu0
    %133 = vset.pattern.permute.xlu0 0
    %134 = vperm.xlu0 %133, %v43
    %v135 = vpop.permute.xlu0 %134
    %v137 = vmul.f32 %v135, %v129
    %vm138 = vcmask 64512
    %v140 = vsel %vm138, %v38, 0
    %142 = vmatprep.subr.mxu0 0.0
    %143 = vmatpush1.msra.mxu0 0.0
    %144 = vmatprep.subr.mxu0 0.0
    %145 = vmatpush1.msra.mxu0 0.0
    %146 = vmatprep.subr.mxu0 0.0
    %147 = vmatpush1.msra.mxu0 0.0
    %148 = vmatprep.subr.mxu0 0.0
    %149 = vmatpush1.msra.mxu0 0.0
    %150 = vmatprep.subr.mxu0 0.0
    %151 = vmatpush1.msra.mxu0 0.0
    %152 = vmatprep.subr.mxu0 0.0
    %153 = vmatpush1.msra.mxu0 0.0
    %154 = vmatprep.subr.mxu0 0.0
    %155 = vmatpush1.msra.mxu0 0.0
    %156 = vmatprep.subr.mxu0 0.0
    %157 = vmatpush1.msra.mxu0 0.0
    %158 = vmatprep.subr.mxu0 0.0
    %159 = vmatpush1.msra.mxu0 0.0
    %160 = vmatprep.subr.mxu0 0.0
    %161 = vmatpush1.msra.mxu0 0.0
    %162 = vmatprep.subr.mxu0 0.0
    %163 = vmatpush1.msra.mxu0 0.0
    %164 = vmatprep.subr.mxu0 0.0
    %165 = vmatpush1.msra.mxu0 0.0
    %166 = vmatprep.subr.mxu0 0.0
    %167 = vmatpush1.msra.mxu0 0.0
    %168 = vmatprep.subr.mxu0 0.0
    %169 = vmatpush1.msra.mxu0 0.0
    %170 = vmatprep.subr.mxu0 0.0
    %171 = vmatpush1.msra.mxu0 0.0
    %172 = vmatprep.subr.mxu0 0.0
    %173 = vmatpush1.msra.mxu0 %v137
    %174 = vmatprep.subr.mxu0 0.0
    %175 = vmatpush2.msra.mxu0 0.0
    %176 = vmatprep.subr.mxu0 0.0
    %177 = vmatpush2.msra.mxu0 0.0
    %178 = vmatprep.subr.mxu0 0.0
    %179 = vmatpush2.msra.mxu0 0.0
    %180 = vmatprep.subr.mxu0 0.0
    %181 = vmatpush2.msra.mxu0 0.0
    %182 = vmatprep.subr.mxu0 0.0
    %183 = vmatpush2.msra.mxu0 0.0
    %184 = vmatprep.subr.mxu0 0.0
    %185 = vmatpush2.msra.mxu0 0.0
    %186 = vmatprep.subr.mxu0 0.0
    %187 = vmatpush2.msra.mxu0 0.0
    %188 = vmatprep.subr.mxu0 0.0
    %189 = vmatpush2.msra.mxu0 0.0
    %190 = vmatprep.subr.mxu0 0.0
    %191 = vmatpush2.msra.mxu0 0.0
    %192 = vmatprep.subr.mxu0 0.0
    %193 = vmatpush2.msra.mxu0 0.0
    %194 = vmatprep.subr.mxu0 0.0
    %195 = vmatpush2.msra.mxu0 0.0
    %196 = vmatprep.subr.mxu0 0.0
    %197 = vmatpush2.msra.mxu0 0.0
    %198 = vmatprep.subr.mxu0 0.0
    %199 = vmatpush2.msra.mxu0 0.0
    %200 = vmatprep.subr.mxu0 0.0
    %201 = vmatpush2.msra.mxu0 0.0
    %202 = vmatprep.subr.mxu0 0.0
    %203 = vmatpush2.msra.mxu0 0.0
    %204 = vmatprep.subr.mxu0 0.0
    %205 = vmatpush2.msra.mxu0 0.0
    %206 = vmatprep.mubr.f32.mxu0 0.0
    %207 = vmatmul.mubr.f32.gmra.mxu0 %v140
    %v208 = vpop.f32.mrf.mxu0
    %v209 = vadd.f32 %v137, %v208
    %v210 = vpop.f32.mrf.mxu0
    %211 = vdwg.mxu0
    %213 = vset.pattern.permute.xlu0 0
    %214 = vperm.xlu0 %213, %v45
    %v215 = vpop.permute.xlu0 %214
    %v217 = vmul.f32 %v215, %v209
    %v218 = vld [vmem:[%s5] sm:$0x1]
    %v220 = vlaneseq
    %v221 = vshrl.u32 %v220, 7
    %v222 = vsub.s32 0, %v221
    %v223 = vrot.slane %v218, %v222
    %v225 = vadd.f32 %v217, %v223
    %v226 = vmax.f32 %v225, 0.0
    %v227 = vadd.f32 %v40, 2.0
    %v228 = vrsqrt.pop %v227
    %v229 = vadd.f32 %v39, 2.0
    %v230 = vrsqrt.pop %v229
    %s231 = scalar_lea.vmem [#allocation2], 128
    %v232 = vld [vmem:[%s231] sm:$0xff]
    %v233 = vld [vmem:[%s231 + $0x8] sm:$0xff]
    %v234 = vld [vmem:[%s231 + $0x10] sm:$0xff]
    %v235 = vld [vmem:[%s231 + $0x18] sm:$0xff]
    %v236 = vld [vmem:[%s231 + $0x20] sm:$0xff]
    %v237 = vld [vmem:[%s231 + $0x28] sm:$0xff]
    %v238 = vld [vmem:[%s231 + $0x30] sm:$0xff]
    %v239 = vld [vmem:[%s231 + $0x38] sm:$0xff]
    %v240 = vld [vmem:[%s231 + $0x40] sm:$0xff]
    %v241 = vld [vmem:[%s231 + $0x48] sm:$0xff]
    %v242 = vld [vmem:[%s231 + $0x50] sm:$0xff]
    %v243 = vld [vmem:[%s231 + $0x58] sm:$0xff]
    %v244 = vld [vmem:[%s231 + $0x60] sm:$0xff]
    %v245 = vld [vmem:[%s231 + $0x68] sm:$0xff]
    %v246 = vld [vmem:[%s231 + $0x70] sm:$0xff]
    %v247 = vld [vmem:[%s231 + $0x78] sm:$0xff]
    %248 = vmatprep.subr.mxu0 0.0
    %249 = vmatpush1.msra.mxu0 %v247
    %250 = vmatprep.subr.mxu0 0.0
    %251 = vmatpush1.msra.mxu0 %v246
    %252 = vmatprep.subr.mxu0 0.0
    %253 = vmatpush1.msra.mxu0 %v245
    %254 = vmatprep.subr.mxu0 0.0
    %255 = vmatpush1.msra.mxu0 %v244
    %256 = vmatprep.subr.mxu0 0.0
    %257 = vmatpush1.msra.mxu0 %v243
    %258 = vmatprep.subr.mxu0 0.0
    %259 = vmatpush1.msra.mxu0 %v242
    %260 = vmatprep.subr.mxu0 0.0
    %261 = vmatpush1.msra.mxu0 %v241
    %262 = vmatprep.subr.mxu0 0.0
    %263 = vmatpush1.msra.mxu0 %v240
    %264 = vmatprep.subr.mxu0 0.0
    %265 = vmatpush1.msra.mxu0 %v239
    %266 = vmatprep.subr.mxu0 0.0
    %267 = vmatpush1.msra.mxu0 %v238
    %268 = vmatprep.subr.mxu0 0.0
    %269 = vmatpush1.msra.mxu0 %v237
    %270 = vmatprep.subr.mxu0 0.0
    %271 = vmatpush1.msra.mxu0 %v236
    %272 = vmatprep.subr.mxu0 0.0
    %273 = vmatpush1.msra.mxu0 %v235
    %274 = vmatprep.subr.mxu0 0.0
    %275 = vmatpush1.msra.mxu0 %v234
    %276 = vmatprep.subr.mxu0 0.0
    %277 = vmatpush1.msra.mxu0 %v233
    %278 = vmatprep.subr.mxu0 0.0
    %279 = vmatpush1.msra.mxu0 %v232
    %280 = vmatprep.subr.mxu0 0.0
    %281 = vmatpush2.msra.mxu0 0.0
    %282 = vmatprep.subr.mxu0 0.0
    %283 = vmatpush2.msra.mxu0 0.0
    %284 = vmatprep.subr.mxu0 0.0
    %285 = vmatpush2.msra.mxu0 0.0
    %286 = vmatprep.subr.mxu0 0.0
    %287 = vmatpush2.msra.mxu0 0.0
    %288 = vmatprep.subr.mxu0 0.0
    %289 = vmatpush2.msra.mxu0 0.0
    %290 = vmatprep.subr.mxu0 0.0
    %291 = vmatpush2.msra.mxu0 0.0
    %292 = vmatprep.subr.mxu0 0.0
    %293 = vmatpush2.msra.mxu0 0.0
    %294 = vmatprep.subr.mxu0 0.0
    %295 = vmatpush2.msra.mxu0 0.0
    %296 = vmatprep.subr.mxu0 0.0
    %297 = vmatpush2.msra.mxu0 0.0
    %298 = vmatprep.subr.mxu0 0.0
    %299 = vmatpush2.msra.mxu0 0.0
    %300 = vmatprep.subr.mxu0 0.0
    %301 = vmatpush2.msra.mxu0 0.0
    %302 = vmatprep.subr.mxu0 0.0
    %303 = vmatpush2.msra.mxu0 0.0
    %304 = vmatprep.subr.mxu0 0.0
    %305 = vmatpush2.msra.mxu0 0.0
    %306 = vmatprep.subr.mxu0 0.0
    %307 = vmatpush2.msra.mxu0 0.0
    %308 = vmatprep.subr.mxu0 0.0
    %309 = vmatpush2.msra.mxu0 0.0
    %310 = vmatprep.subr.mxu0 0.0
    %311 = vmatpush2.msra.mxu0 0.0
    %312 = vmatprep.mubr.f32.mxu0 0.0
    %313 = vmatmul.mubr.f32.gmra.mxu0 %v226
    %v314 = vpop.f32.mrf.mxu0
    %v315 = vadd.f32 0.0, %v314
    %v316 = vpop.f32.mrf.mxu0
    %317 = vdwg.mxu0
    %319 = vset.pattern.permute.xlu0 0
    %320 = vperm.xlu0 %319, %v228
    %v321 = vpop.permute.xlu0 %320
    %v323 = vmul.f32 %v321, %v315
    %v324 = vmul.f32 %v323, 2.0
    %325 = vmatprep.subr.mxu0 0.0
    %326 = vmatpush1.msra.mxu0 0.0
    %327 = vmatprep.subr.mxu0 0.0
    %328 = vmatpush1.msra.mxu0 0.0
    %329 = vmatprep.subr.mxu0 0.0
    %330 = vmatpush1.msra.mxu0 0.0
    %331 = vmatprep.subr.mxu0 0.0
    %332 = vmatpush1.msra.mxu0 0.0
    %333 = vmatprep.subr.mxu0 0.0
    %334 = vmatpush1.msra.mxu0 0.0
    %335 = vmatprep.subr.mxu0 0.0
    %336 = vmatpush1.msra.mxu0 0.0
    %337 = vmatprep.subr.mxu0 0.0
    %338 = vmatpush1.msra.mxu0 0.0
    %339 = vmatprep.subr.mxu0 0.0
    %340 = vmatpush1.msra.mxu0 0.0
    %341 = vmatprep.subr.mxu0 0.0
    %342 = vmatpush1.msra.mxu0 0.0
    %343 = vmatprep.subr.mxu0 0.0
    %344 = vmatpush1.msra.mxu0 0.0
    %345 = vmatprep.subr.mxu0 0.0
    %346 = vmatpush1.msra.mxu0 0.0
    %347 = vmatprep.subr.mxu0 0.0
    %348 = vmatpush1.msra.mxu0 0.0
    %349 = vmatprep.subr.mxu0 0.0
    %350 = vmatpush1.msra.mxu0 0.0
    %351 = vmatprep.subr.mxu0 0.0
    %352 = vmatpush1.msra.mxu0 0.0
    %353 = vmatprep.subr.mxu0 0.0
    %354 = vmatpush1.msra.mxu0 0.0
    %355 = vmatprep.subr.mxu0 0.0
    %356 = vmatpush1.msra.mxu0 %v323
    %357 = vmatprep.subr.mxu0 0.0
    %358 = vmatpush2.msra.mxu0 0.0
    %359 = vmatprep.subr.mxu0 0.0
    %360 = vmatpush2.msra.mxu0 0.0
    %361 = vmatprep.subr.mxu0 0.0
    %362 = vmatpush2.msra.mxu0 0.0
    %363 = vmatprep.subr.mxu0 0.0
    %364 = vmatpush2.msra.mxu0 0.0
    %365 = vmatprep.subr.mxu0 0.0
    %366 = vmatpush2.msra.mxu0 0.0
    %367 = vmatprep.subr.mxu0 0.0
    %368 = vmatpush2.msra.mxu0 0.0
    %369 = vmatprep.subr.mxu0 0.0
    %370 = vmatpush2.msra.mxu0 0.0
    %371 = vmatprep.subr.mxu0 0.0
    %372 = vmatpush2.msra.mxu0 0.0
    %373 = vmatprep.subr.mxu0 0.0
    %374 = vmatpush2.msra.mxu0 0.0
    %375 = vmatprep.subr.mxu0 0.0
    %376 = vmatpush2.msra.mxu0 0.0
    %377 = vmatprep.subr.mxu0 0.0
    %378 = vmatpush2.msra.mxu0 0.0
    %379 = vmatprep.subr.mxu0 0.0
    %380 = vmatpush2.msra.mxu0 0.0
    %381 = vmatprep.subr.mxu0 0.0
    %382 = vmatpush2.msra.mxu0 0.0
    %383 = vmatprep.subr.mxu0 0.0
    %384 = vmatpush2.msra.mxu0 0.0
    %385 = vmatprep.subr.mxu0 0.0
    %386 = vmatpush2.msra.mxu0 0.0
    %387 = vmatprep.subr.mxu0 0.0
    %388 = vmatpush2.msra.mxu0 0.0
    %389 = vmatprep.mubr.f32.mxu0 0.0
    %390 = vmatmul.mubr.f32.gmra.mxu0 %v140
    %v391 = vpop.f32.mrf.mxu0
    %v392 = vadd.f32 %v324, %v391
    %v393 = vpop.f32.mrf.mxu0
    %394 = vdwg.mxu0
    %396 = vset.pattern.permute.xlu0 0
    %397 = vperm.xlu0 %396, %v230
    %v398 = vpop.permute.xlu0 %397
    %v400 = vmul.f32 %v398, %v392
    %s401 = scalar_lea.vmem %s5, 1
    %v402 = vld [vmem:[%s401] sm:$0x1]
    %v404 = vlaneseq
    %v405 = vshrl.u32 %v404, 7
    %v406 = vsub.s32 0, %v405
    %v407 = vrot.slane %v402, %v406
    %v409 = vadd.f32 %v400, %v407
    %v410 = vmax.f32 %v409, 0.0
    %v411 = vadd.f32 %v40, 3.0
    %v412 = vrsqrt.pop %v411
    %v413 = vadd.f32 %v39, 3.0
    %v414 = vrsqrt.pop %v413
    %s415 = scalar_lea.vmem [#allocation2], 256
    %v416 = vld [vmem:[%s415] sm:$0xff]
    %v417 = vld [vmem:[%s415 + $0x8] sm:$0xff]
    %v418 = vld [vmem:[%s415 + $0x10] sm:$0xff]
    %v419 = vld [vmem:[%s415 + $0x18] sm:$0xff]
    %v420 = vld [vmem:[%s415 + $0x20] sm:$0xff]
    %v421 = vld [vmem:[%s415 + $0x28] sm:$0xff]
    %v422 = vld [vmem:[%s415 + $0x30] sm:$0xff]
    %v423 = vld [vmem:[%s415 + $0x38] sm:$0xff]
    %v424 = vld [vmem:[%s415 + $0x40] sm:$0xff]
    %v425 = vld [vmem:[%s415 + $0x48] sm:$0xff]
    %v426 = vld [vmem:[%s415 + $0x50] sm:$0xff]
    %v427 = vld [vmem:[%s415 + $0x58] sm:$0xff]
    %v428 = vld [vmem:[%s415 + $0x60] sm:$0xff]
    %v429 = vld [vmem:[%s415 + $0x68] sm:$0xff]
    %v430 = vld [vmem:[%s415 + $0x70] sm:$0xff]
    %v431 = vld [vmem:[%s415 + $0x78] sm:$0xff]
    %432 = vmatprep.subr.mxu0 0.0
    %433 = vmatpush1.msra.mxu0 %v431
    %434 = vmatprep.subr.mxu0 0.0
    %435 = vmatpush1.msra.mxu0 %v430
    %436 = vmatprep.subr.mxu0 0.0
    %437 = vmatpush1.msra.mxu0 %v429
    %438 = vmatprep.subr.mxu0 0.0
    %439 = vmatpush1.msra.mxu0 %v428
    %440 = vmatprep.subr.mxu0 0.0
    %441 = vmatpush1.msra.mxu0 %v427
    %442 = vmatprep.subr.mxu0 0.0
    %443 = vmatpush1.msra.mxu0 %v426
    %444 = vmatprep.subr.mxu0 0.0
    %445 = vmatpush1.msra.mxu0 %v425
    %446 = vmatprep.subr.mxu0 0.0
    %447 = vmatpush1.msra.mxu0 %v424
    %448 = vmatprep.subr.mxu0 0.0
    %449 = vmatpush1.msra.mxu0 %v423
    %450 = vmatprep.subr.mxu0 0.0
    %451 = vmatpush1.msra.mxu0 %v422
    %452 = vmatprep.subr.mxu0 0.0
    %453 = vmatpush1.msra.mxu0 %v421
    %454 = vmatprep.subr.mxu0 0.0
    %455 = vmatpush1.msra.mxu0 %v420
    %456 = vmatprep.subr.mxu0 0.0
    %457 = vmatpush1.msra.mxu0 %v419
    %458 = vmatprep.subr.mxu0 0.0
    %459 = vmatpush1.msra.mxu0 %v418
    %460 = vmatprep.subr.mxu0 0.0
    %461 = vmatpush1.msra.mxu0 %v417
    %462 = vmatprep.subr.mxu0 0.0
    %463 = vmatpush1.msra.mxu0 %v416
    %464 = vmatprep.subr.mxu0 0.0
    %465 = vmatpush2.msra.mxu0 0.0
    %466 = vmatprep.subr.mxu0 0.0
    %467 = vmatpush2.msra.mxu0 0.0
    %468 = vmatprep.subr.mxu0 0.0
    %469 = vmatpush2.msra.mxu0 0.0
    %470 = vmatprep.subr.mxu0 0.0
    %471 = vmatpush2.msra.mxu0 0.0
    %472 = vmatprep.subr.mxu0 0.0
    %473 = vmatpush2.msra.mxu0 0.0
    %474 = vmatprep.subr.mxu0 0.0
    %475 = vmatpush2.msra.mxu0 0.0
    %476 = vmatprep.subr.mxu0 0.0
    %477 = vmatpush2.msra.mxu0 0.0
    %478 = vmatprep.subr.mxu0 0.0
    %479 = vmatpush2.msra.mxu0 0.0
    %480 = vmatprep.subr.mxu0 0.0
    %481 = vmatpush2.msra.mxu0 0.0
    %482 = vmatprep.subr.mxu0 0.0
    %483 = vmatpush2.msra.mxu0 0.0
    %484 = vmatprep.subr.mxu0 0.0
    %485 = vmatpush2.msra.mxu0 0.0
    %486 = vmatprep.subr.mxu0 0.0
    %487 = vmatpush2.msra.mxu0 0.0
    %488 = vmatprep.subr.mxu0 0.0
    %489 = vmatpush2.msra.mxu0 0.0
    %490 = vmatprep.subr.mxu0 0.0
    %491 = vmatpush2.msra.mxu0 0.0
    %492 = vmatprep.subr.mxu0 0.0
    %493 = vmatpush2.msra.mxu0 0.0
    %494 = vmatprep.subr.mxu0 0.0
    %495 = vmatpush2.msra.mxu0 0.0
    %496 = vmatprep.mubr.f32.mxu0 0.0
    %497 = vmatmul.mubr.f32.gmra.mxu0 %v410
    %v498 = vpop.f32.mrf.mxu0
    %v499 = vadd.f32 0.0, %v498
    %v500 = vpop.f32.mrf.mxu0
    %501 = vdwg.mxu0
    %503 = vset.pattern.permute.xlu0 0
    %504 = vperm.xlu0 %503, %v412
    %v505 = vpop.permute.xlu0 %504
    %v507 = vmul.f32 %v505, %v499
    %v508 = vmul.f32 %v507, 3.0
    %509 = vmatprep.subr.mxu0 0.0
    %510 = vmatpush1.msra.mxu0 0.0
    %511 = vmatprep.subr.mxu0 0.0
    %512 = vmatpush1.msra.mxu0 0.0
    %513 = vmatprep.subr.mxu0 0.0
    %514 = vmatpush1.msra.mxu0 0.0
    %515 = vmatprep.subr.mxu0 0.0
    %516 = vmatpush1.msra.mxu0 0.0
    %517 = vmatprep.subr.mxu0 0.0
    %518 = vmatpush1.msra.mxu0 0.0
    %519 = vmatprep.subr.mxu0 0.0
    %520 = vmatpush1.msra.mxu0 0.0
    %521 = vmatprep.subr.mxu0 0.0
    %522 = vmatpush1.msra.mxu0 0.0
    %523 = vmatprep.subr.mxu0 0.0
    %524 = vmatpush1.msra.mxu0 0.0
    %525 = vmatprep.subr.mxu0 0.0
    %526 = vmatpush1.msra.mxu0 0.0
    %527 = vmatprep.subr.mxu0 0.0
    %528 = vmatpush1.msra.mxu0 0.0
    %529 = vmatprep.subr.mxu0 0.0
    %530 = vmatpush1.msra.mxu0 0.0
    %531 = vmatprep.subr.mxu0 0.0
    %532 = vmatpush1.msra.mxu0 0.0
    %533 = vmatprep.subr.mxu0 0.0
    %534 = vmatpush1.msra.mxu0 0.0
    %535 = vmatprep.subr.mxu0 0.0
    %536 = vmatpush1.msra.mxu0 0.0
    %537 = vmatprep.subr.mxu0 0.0
    %538 = vmatpush1.msra.mxu0 0.0
    %539 = vmatprep.subr.mxu0 0.0
    %540 = vmatpush1.msra.mxu0 %v507
    %541 = vmatprep.subr.mxu0 0.0
    %542 = vmatpush2.msra.mxu0 0.0
    %543 = vmatprep.subr.mxu0 0.0
    %544 = vmatpush2.msra.mxu0 0.0
    %545 = vmatprep.subr.mxu0 0.0
    %546 = vmatpush2.msra.mxu0 0.0
    %547 = vmatprep.subr.mxu0 0.0
    %548 = vmatpush2.msra.mxu0 0.0
    %549 = vmatprep.subr.mxu0 0.0
    %550 = vmatpush2.msra.mxu0 0.0
    %551 = vmatprep.subr.mxu0 0.0
    %552 = vmatpush2.msra.mxu0 0.0
    %553 = vmatprep.subr.mxu0 0.0
    %554 = vmatpush2.msra.mxu0 0.0
    %555 = vmatprep.subr.mxu0 0.0
    %556 = vmatpush2.msra.mxu0 0.0
    %557 = vmatprep.subr.mxu0 0.0
    %558 = vmatpush2.msra.mxu0 0.0
    %559 = vmatprep.subr.mxu0 0.0
    %560 = vmatpush2.msra.mxu0 0.0
    %561 = vmatprep.subr.mxu0 0.0
    %562 = vmatpush2.msra.mxu0 0.0
    %563 = vmatprep.subr.mxu0 0.0
    %564 = vmatpush2.msra.mxu0 0.0
    %565 = vmatprep.subr.mxu0 0.0
    %566 = vmatpush2.msra.mxu0 0.0
    %567 = vmatprep.subr.mxu0 0.0
    %568 = vmatpush2.msra.mxu0 0.0
    %569 = vmatprep.subr.mxu0 0.0
    %570 = vmatpush2.msra.mxu0 0.0
    %571 = vmatprep.subr.mxu0 0.0
    %572 = vmatpush2.msra.mxu0 0.0
    %573 = vmatprep.mubr.f32.mxu0 0.0
    %574 = vmatmul.mubr.f32.gmra.mxu0 %v140
    %v575 = vpop.f32.mrf.mxu0
    %v576 = vadd.f32 %v508, %v575
    %v577 = vpop.f32.mrf.mxu0
    %578 = vdwg.mxu0
    %580 = vset.pattern.permute.xlu0 0
    %581 = vperm.xlu0 %580, %v414
    %v582 = vpop.permute.xlu0 %581
    %v584 = vmul.f32 %v582, %v576
    %s585 = scalar_lea.vmem %s5, 2
    %v586 = vld [vmem:[%s585] sm:$0x1]
    %v588 = vlaneseq
    %v589 = vshrl.u32 %v588, 7
    %v590 = vsub.s32 0, %v589
    %v591 = vrot.slane %v586, %v590
    %v593 = vadd.f32 %v584, %v591
    %594 = vst [vmem:[#allocation5] sm:$0xff] %v593
    // Predicated region
    $region30: #{tpu_custom_call.1} parent=1 // pred_check
      _
    $region31: #{tpu_custom_call.1} parent=1 // pred_check_branch
      %596 = sbr.rel (0) target = $region33
    $region32: #{tpu_custom_call.1} parent=1 // pred_region
      %s598 = ssub.s32 128, 128
      %599 = vsyncadd [#allocation4], %s598
      %s601 = sshll.u32 [#allocation5], 4
      %s602 = int_to_ptr.vmem [resolvable:$true] %s601
      %604 = dma.vmem_to_hbm [thread:$0]  %s602, 128, %s6, [#allocation4]
    $region33: #{tpu_custom_call.1} parent=1 // pred_fallthru
      _
    // Predicated region
    $region34: #{tpu_custom_call.1} parent=1 // pred_check
      _
    $region35: #{tpu_custom_call.1} parent=1 // pred_check_branch
      %606 = sbr.rel (0) target = $region37
    $region36: #{tpu_custom_call.1} parent=1 // pred_region
      %607 = dma.done [#allocation4], 128
    $region37: #{tpu_custom_call.1} parent=1 // pred_fallthru
      _
    %608 = vsyncpa [#allocation3], 1
    %609 = vsyncpa [#allocation4], 1

</llo_original>
